<compile_context>
chip_gen: v7x
topology: tpu7x:2x2x1
jax: 0.10.0
libtpu: 0.0.40
codegen_flags: <defaults>
</compile_context>

<pallas_src>
import jax
import jax.numpy as jnp
from jax.experimental import pallas as pl
from jax.experimental.pallas import tpu as pltpu


def _round_up(n, m):
    return (n + m - 1) // m * m


def _vmem_capacity_bytes():
    """Physical per-core VMEM; conservative fallback if the query fails."""
    try:
        info = pltpu.get_tpu_info()
        cap = getattr(info, "vmem_capacity_bytes", None)
        if cap:
            return int(cap)
    except Exception:
        pass
    return 64 << 20  # v7x-sized fallback (smallest of v5e/v6e/v7x)


def mlp_kernel(x_ref, w1_ref, b1_ref, w2_ref, b2_ref, w3_ref, b3_ref, o_ref,
               h1_ref, h2_ref):
    # dense1: bf16 MXU operands, f32 accumulation; bias + ReLU in f32 on VPU
    # (v5e has no bf16 VALU), then stage the activation as bf16 VMEM scratch.
    x = x_ref[...].astype(jnp.bfloat16)
    h1 = jnp.dot(x, w1_ref[...], preferred_element_type=jnp.float32)
    h1_ref[...] = jnp.maximum(h1 + b1_ref[...], 0.0).astype(jnp.bfloat16)
    # dropout1: eval-mode identity.

    # dense2
    h2 = jnp.dot(h1_ref[...], w2_ref[...], preferred_element_type=jnp.float32)
    h2_ref[...] = jnp.maximum(h2 + b2_ref[...], 0.0).astype(jnp.bfloat16)
    # dropout2: eval-mode identity.

    # output_layer
    out = jnp.dot(h2_ref[...], w3_ref[...], preferred_element_type=jnp.float32)
    o_ref[...] = (out + b3_ref[...]).astype(o_ref.dtype)


def prepare_params(params):
    """One-time padding (lane-dense, x128) + bf16 cast of weights; f32 biases.

    Hoisted out of mlp_forward so repeated forward passes pay no per-call
    weight HBM traffic beyond the kernel's own (once-per-call) parameter DMA.
    """
    w1, b1, w2, b2, w3, b3 = (params["w1"], params["b1"], params["w2"],
                              params["b2"], params["w3"], params["b3"])
    F, H = w1.shape
    C = w3.shape[1]
    Fp, Hp, Cp = _round_up(F, 128), _round_up(H, 128), _round_up(C, 128)
    bf16, f32 = jnp.bfloat16, jnp.float32

    def pad2(a, rows, cols, dt):
        a = a.astype(dt)
        if a.shape == (rows, cols):
            return a
        return jnp.zeros((rows, cols), dt).at[:a.shape[0], :a.shape[1]].set(a)

    return {
        "w1": pad2(w1, Fp, Hp, bf16), "b1": pad2(b1.reshape(1, -1), 1, Hp, f32),
        "w2": pad2(w2, Hp, Fp, bf16), "b2": pad2(b2.reshape(1, -1), 1, Fp, f32),
        "w3": pad2(w3, Fp, Cp, bf16), "b3": pad2(b3.reshape(1, -1), 1, Cp, f32),
        "dims": (F, H, C, Fp, Hp, Cp),
    }


def mlp_forward(x, prepared, *, tb=512):
    """x: (B, in_features) float32. prepared: output of prepare_params()."""
    F, H, C, Fp, Hp, Cp = prepared["dims"]
    B = x.shape[0]
    assert x.shape[1] == F, "x feature dim does not match prepared params"

    cap = _vmem_capacity_bytes()
    budget = cap // 2  # generation-aware working budget (leaves headroom)

    # Resident-parameter footprint (Buffered(1): single copy of each).
    weight_bytes = (Fp * Hp + Hp * Fp + Fp * Cp) * 2 + (Hp + Fp + Cp) * 4
    if weight_bytes > int(0.8 * budget):
        # TODO(synk): K/N-tiled fallback (reduction grid axis marked
        # "arbitrary" + f32 accumulator scratch) for very large in_features.
        raise ValueError(
            "in_features/hidden too large for the resident-weight MLP kernel")

    def tile_bytes(t):
        # x tile (f32, double-buffered) + out tile (f32, double-buffered)
        # + bf16 h1/h2 scratch.
        return (2 * t * Fp * 4) + (2 * t * Cp * 4) + (t * Hp * 2) + (t * Fp * 2)

    # Batch tile: multiple of 8, capped by the caller and the VMEM budget.
    TB = min(_round_up(max(tb, 8), 8), _round_up(B, 8))
    while TB > 8 and weight_bytes + tile_bytes(TB) > budget:
        TB = max(8, (TB // 2) // 8 * 8)

    # Minimal-padding tile count; >= 2 tiles (when B >= 16) so v7x's two
    # TensorCores can split the "parallel" batch axis.
    n_tiles = -(-B // TB)
    if B >= 16 and n_tiles < 2:
        n_tiles = 2
    TB = _round_up(-(-B // n_tiles), 8)
    Bp = n_tiles * TB

    # Explicit scoped-VMEM limit: 2x weights (covers the non-Buffered
    # fallback) + pipelined tiles + headroom, floored at 16 MiB, capped at
    # physical capacity.
    vmem_limit = int(min(
        cap, max(16 << 20,
                 2 * weight_bytes + int(1.25 * tile_bytes(TB)) + (8 << 20))))

    # Pad x only when actually required (keeps f32; kernel casts per tile).
    if (Bp, Fp) != (B, F):
        xp = jnp.zeros((Bp, Fp), x.dtype).at[:B, :F].set(x)
    else:
        xp = x

    param_arrays = (prepared["w1"], prepared["b1"], prepared["w2"],
                    prepared["b2"], prepared["w3"], prepared["b3"])

    def build(param_pipeline_mode):
        def pspec(shape):
            if param_pipeline_mode is None:
                return pl.BlockSpec(shape, lambda i: (0, 0))
            return pl.BlockSpec(shape, lambda i: (0, 0),
                                pipeline_mode=param_pipeline_mode)

        in_specs = [
            # Streamed per batch tile (double-buffered by the pipeline):
            pl.BlockSpec((TB, Fp), lambda i: (i, 0)),
            # Parameters: constant block index -> resident in VMEM.
            pspec((Fp, Hp)), pspec((1, Hp)),
            pspec((Hp, Fp)), pspec((1, Fp)),
            pspec((Fp, Cp)), pspec((1, Cp)),
        ]
        return pl.pallas_call(
            mlp_kernel,
            out_shape=jax.ShapeDtypeStruct((Bp, Cp), jnp.float32),
            grid=(Bp // TB,),
            in_specs=in_specs,
            out_specs=pl.BlockSpec((TB, Cp), lambda i: (i, 0)),
            scratch_shapes=[pltpu.VMEM((TB, Hp), jnp.bfloat16),
                            pltpu.VMEM((TB, Fp), jnp.bfloat16)],
            compiler_params=pltpu.CompilerParams(
                dimension_semantics=("parallel",),
                vmem_limit_bytes=vmem_limit),
        )

    try:
        # Single-buffered resident parameters (halves their VMEM footprint).
        out_padded = build(pl.Buffered(1))(xp, *param_arrays)
    except Exception:
        # TODO(synk): drop this fallback once Buffered(1) resident-weight mode
        # is confirmed across all deployed jax versions.
        out_padded = build(None)(xp, *param_arrays)

    return out_padded[:B, :C]


def init_params(key, in_features, num_classes):
    """Deterministic init mimicking nn.Linear's uniform(-1/sqrt(fan_in), ...)."""
    hidden = in_features * 2
    keys = jax.random.split(key, 6)

    def linear(kw, kb, fan_in, fan_out):
        bound = 1.0 / jnp.sqrt(float(fan_in))
        # stored pre-transposed: (fan_in, fan_out)  (== torch W.T)
        w = jax.random.uniform(kw, (fan_in, fan_out), jnp.float32, -bound, bound)
        b = jax.random.uniform(kb, (1, fan_out), jnp.float32, -bound, bound)
        return w, b

    w1, b1 = linear(keys[0], keys[1], in_features, hidden)
    w2, b2 = linear(keys[2], keys[3], hidden, in_features)
    w3, b3 = linear(keys[4], keys[5], in_features, num_classes)
    return {"w1": w1, "b1": b1, "w2": w2, "b2": b2, "w3": w3, "b3": b3}


def mlp_reference_f32(x, p):
    h1 = jnp.maximum(x @ p["w1"] + p["b1"], 0.0)
    h2 = jnp.maximum(h1 @ p["w2"] + p["b2"], 0.0)
    return h2 @ p["w3"] + p["b3"]


def mlp_reference_bf16(x, p):
    """Emulates the kernel's bf16-operand / f32-accumulate math for a tight check."""
    bf = jnp.bfloat16
    h1 = jnp.dot(x.astype(bf), p["w1"].astype(bf),
                 preferred_element_type=jnp.float32) + p["b1"]
    h1 = jnp.maximum(h1, 0.0).astype(bf)
    h2 = jnp.dot(h1, p["w2"].astype(bf),
                 preferred_element_type=jnp.float32) + p["b2"]
    h2 = jnp.maximum(h2, 0.0).astype(bf)
    return jnp.dot(h2, p["w3"].astype(bf),
                   preferred_element_type=jnp.float32) + p["b3"]


if __name__ == "__main__":
    key = jax.random.PRNGKey(0)
    k_x, k_p, k_x2 = jax.random.split(key, 3)

    batch = 8
    in_features = 32
    num_classes = 10

    x = jax.random.normal(k_x, (batch, in_features), jnp.float32)
    params = init_params(k_p, in_features, num_classes)
    prepared = prepare_params(params)  # one-time (hoisted out of the forward)

    # Case 1: single batch tile.
    out = jax.block_until_ready(mlp_forward(x, prepared))
    assert out.shape == (batch, num_classes)
    ref_bf16 = mlp_reference_bf16(x, params)
    assert jnp.allclose(out, ref_bf16, atol=2e-3, rtol=2e-3)
    ref_f32 = mlp_reference_f32(x, params)
    assert jnp.allclose(out, ref_f32, atol=1e-1, rtol=1e-1)

    # Case 2: unaligned batch -> exercises padding and the >=2-tile grid path.
    x2 = jax.random.normal(k_x2, (40, in_features), jnp.float32)
    out2 = jax.block_until_ready(mlp_forward(x2, prepared))
    assert out2.shape == (40, num_classes)
    assert jnp.allclose(out2, mlp_reference_bf16(x2, params), atol=2e-3, rtol=2e-3)

    print("KERNEL_OK")
</pallas_src>

<mosaic_0001>
module attributes {stable_mosaic.version = 11 : i64} {
  func.func @mlp_kernel(%arg0: i32, %arg1: memref<8x128xf32, #tpu.memory_space<vmem>>, %arg2: memref<128x128xbf16, #tpu.memory_space<vmem>>, %arg3: memref<1x128xf32, #tpu.memory_space<vmem>>, %arg4: memref<128x128xbf16, #tpu.memory_space<vmem>>, %arg5: memref<1x128xf32, #tpu.memory_space<vmem>>, %arg6: memref<128x128xbf16, #tpu.memory_space<vmem>>, %arg7: memref<1x128xf32, #tpu.memory_space<vmem>>, %arg8: memref<8x128xf32, #tpu.memory_space<vmem>>, %arg9: memref<8x128xbf16, #tpu.memory_space<vmem>>, %arg10: memref<8x128xbf16, #tpu.memory_space<vmem>>) attributes {dimension_semantics = [#tpu.dimension_semantics<parallel>], iteration_bounds = array<i64: 1>, scalar_prefetch = 0 : i64, scratch_operands = 2 : i64, tpu.core_type = #tpu.core_type<tc>, window_params = [{transform_indices = @transform_0, window_bounds = array<i64: 8, 128>}, {pipeline_mode = #tpu.pipeline_mode<synchronous>, transform_indices = @transform_1, window_bounds = array<i64: 128, 128>}, {pipeline_mode = #tpu.pipeline_mode<synchronous>, transform_indices = @transform_2, window_bounds = array<i64: 1, 128>}, {pipeline_mode = #tpu.pipeline_mode<synchronous>, transform_indices = @transform_3, window_bounds = array<i64: 128, 128>}, {pipeline_mode = #tpu.pipeline_mode<synchronous>, transform_indices = @transform_4, window_bounds = array<i64: 1, 128>}, {pipeline_mode = #tpu.pipeline_mode<synchronous>, transform_indices = @transform_5, window_bounds = array<i64: 128, 128>}, {pipeline_mode = #tpu.pipeline_mode<synchronous>, transform_indices = @transform_6, window_bounds = array<i64: 1, 128>}, {transform_indices = @transform_7, window_bounds = array<i64: 8, 128>}]} {
    %c0 = arith.constant 0 : index
    %c0_0 = arith.constant 0 : index
    %0 = vector.load %arg1[%c0, %c0_0] : memref<8x128xf32, #tpu.memory_space<vmem>>, vector<8x128xf32>
    %1 = arith.truncf %0 : vector<8x128xf32> to vector<8x128xbf16>
    %c0_1 = arith.constant 0 : index
    %c0_2 = arith.constant 0 : index
    %2 = vector.load %arg2[%c0_1, %c0_2] : memref<128x128xbf16, #tpu.memory_space<vmem>>, vector<128x128xbf16>
    %cst = arith.constant dense<0.000000e+00> : vector<8x128xf32>
    %3 = tpu.matmul %1, %2, %cst {dimension_numbers = #tpu.dot_dimension_numbers<[1], [0], [0], [1], [0, 0, 1, 1], [], []>} : vector<8x128xbf16>, vector<128x128xbf16>, vector<8x128xf32> -> vector<8x128xf32>
    %c0_3 = arith.constant 0 : index
    %c0_4 = arith.constant 0 : index
    %4 = vector.load %arg3[%c0_3, %c0_4] : memref<1x128xf32, #tpu.memory_space<vmem>>, vector<1x128xf32>
    %5 = vector.broadcast %4 : vector<1x128xf32> to vector<8x128xf32>
    %6 = arith.addf %3, %5 : vector<8x128xf32>
    %cst_5 = arith.constant 0.000000e+00 : f32
    %7 = vector.broadcast %cst_5 : f32 to vector<8x128xf32>
    %8 = arith.maximumf %6, %7 : vector<8x128xf32>
    %9 = arith.truncf %8 : vector<8x128xf32> to vector<8x128xbf16>
    %c0_6 = arith.constant 0 : index
    %c0_7 = arith.constant 0 : index
    %10 = vector.load %arg9[%c0_6, %c0_7] : memref<8x128xbf16, #tpu.memory_space<vmem>>, vector<8x128xbf16>
    tpu.vector_store %arg9[%c0_6, %c0_7], %9 {strides = array<i32>} : memref<8x128xbf16, #tpu.memory_space<vmem>>, vector<8x128xbf16>,
    %c0_8 = arith.constant 0 : index
    %c0_9 = arith.constant 0 : index
    %11 = vector.load %arg9[%c0_8, %c0_9] : memref<8x128xbf16, #tpu.memory_space<vmem>>, vector<8x128xbf16>
    %c0_10 = arith.constant 0 : index
    %c0_11 = arith.constant 0 : index
    %12 = vector.load %arg4[%c0_10, %c0_11] : memref<128x128xbf16, #tpu.memory_space<vmem>>, vector<128x128xbf16>
    %cst_12 = arith.constant dense<0.000000e+00> : vector<8x128xf32>
    %13 = tpu.matmul %11, %12, %cst_12 {dimension_numbers = #tpu.dot_dimension_numbers<[1], [0], [0], [1], [0, 0, 1, 1], [], []>} : vector<8x128xbf16>, vector<128x128xbf16>, vector<8x128xf32> -> vector<8x128xf32>
    %c0_13 = arith.constant 0 : index
    %c0_14 = arith.constant 0 : index
    %14 = vector.load %arg5[%c0_13, %c0_14] : memref<1x128xf32, #tpu.memory_space<vmem>>, vector<1x128xf32>
    %15 = vector.broadcast %14 : vector<1x128xf32> to vector<8x128xf32>
    %16 = arith.addf %13, %15 : vector<8x128xf32>
    %cst_15 = arith.constant 0.000000e+00 : f32
    %17 = vector.broadcast %cst_15 : f32 to vector<8x128xf32>
    %18 = arith.maximumf %16, %17 : vector<8x128xf32>
    %19 = arith.truncf %18 : vector<8x128xf32> to vector<8x128xbf16>
    %c0_16 = arith.constant 0 : index
    %c0_17 = arith.constant 0 : index
    %20 = vector.load %arg10[%c0_16, %c0_17] : memref<8x128xbf16, #tpu.memory_space<vmem>>, vector<8x128xbf16>
    tpu.vector_store %arg10[%c0_16, %c0_17], %19 {strides = array<i32>} : memref<8x128xbf16, #tpu.memory_space<vmem>>, vector<8x128xbf16>,
    %c0_18 = arith.constant 0 : index
    %c0_19 = arith.constant 0 : index
    %21 = vector.load %arg10[%c0_18, %c0_19] : memref<8x128xbf16, #tpu.memory_space<vmem>>, vector<8x128xbf16>
    %c0_20 = arith.constant 0 : index
    %c0_21 = arith.constant 0 : index
    %22 = vector.load %arg6[%c0_20, %c0_21] : memref<128x128xbf16, #tpu.memory_space<vmem>>, vector<128x128xbf16>
    %cst_22 = arith.constant dense<0.000000e+00> : vector<8x128xf32>
    %23 = tpu.matmul %21, %22, %cst_22 {dimension_numbers = #tpu.dot_dimension_numbers<[1], [0], [0], [1], [0, 0, 1, 1], [], []>} : vector<8x128xbf16>, vector<128x128xbf16>, vector<8x128xf32> -> vector<8x128xf32>
    %c0_23 = arith.constant 0 : index
    %c0_24 = arith.constant 0 : index
    %24 = vector.load %arg7[%c0_23, %c0_24] : memref<1x128xf32, #tpu.memory_space<vmem>>, vector<1x128xf32>
    %25 = vector.broadcast %24 : vector<1x128xf32> to vector<8x128xf32>
    %26 = arith.addf %23, %25 : vector<8x128xf32>
    %c0_25 = arith.constant 0 : index
    %c0_26 = arith.constant 0 : index
    %27 = vector.load %arg8[%c0_25, %c0_26] : memref<8x128xf32, #tpu.memory_space<vmem>>, vector<8x128xf32>
    tpu.vector_store %arg8[%c0_25, %c0_26], %26 {strides = array<i32>} : memref<8x128xf32, #tpu.memory_space<vmem>>, vector<8x128xf32>,
    return
  }
  func.func @transform_0(%arg0: i32) -> (i32, i32) {
    %c0_i32 = arith.constant 0 : i32
    %c0_i32_0 = arith.constant 0 : i32
    return %arg0, %c0_i32 : i32, i32
  }
  func.func @transform_1(%arg0: i32) -> (i32, i32) {
    %c0_i32 = arith.constant 0 : i32
    %c0_i32_0 = arith.constant 0 : i32
    %c0_i32_1 = arith.constant 0 : i32
    return %c0_i32, %c0_i32_0 : i32, i32
  }
  func.func @transform_2(%arg0: i32) -> (i32, i32) {
    %c0_i32 = arith.constant 0 : i32
    %c0_i32_0 = arith.constant 0 : i32
    %c0_i32_1 = arith.constant 0 : i32
    return %c0_i32, %c0_i32_0 : i32, i32
  }
  func.func @transform_3(%arg0: i32) -> (i32, i32) {
    %c0_i32 = arith.constant 0 : i32
    %c0_i32_0 = arith.constant 0 : i32
    %c0_i32_1 = arith.constant 0 : i32
    return %c0_i32, %c0_i32_0 : i32, i32
  }
  func.func @transform_4(%arg0: i32) -> (i32, i32) {
    %c0_i32 = arith.constant 0 : i32
    %c0_i32_0 = arith.constant 0 : i32
    %c0_i32_1 = arith.constant 0 : i32
    return %c0_i32, %c0_i32_0 : i32, i32
  }
  func.func @transform_5(%arg0: i32) -> (i32, i32) {
    %c0_i32 = arith.constant 0 : i32
    %c0_i32_0 = arith.constant 0 : i32
    %c0_i32_1 = arith.constant 0 : i32
    return %c0_i32, %c0_i32_0 : i32, i32
  }
  func.func @transform_6(%arg0: i32) -> (i32, i32) {
    %c0_i32 = arith.constant 0 : i32
    %c0_i32_0 = arith.constant 0 : i32
    %c0_i32_1 = arith.constant 0 : i32
    return %c0_i32, %c0_i32_0 : i32, i32
  }
  func.func @transform_7(%arg0: i32) -> (i32, i32) {
    %c0_i32 = arith.constant 0 : i32
    %c0_i32_0 = arith.constant 0 : i32
    return %arg0, %c0_i32 : i32, i32
  }
}

module attributes {stable_mosaic.version = 11 : i64} {
  func.func @mlp_kernel(%arg0: i32, %arg1: memref<8x128xf32, #tpu.memory_space<vmem>>, %arg2: memref<128x128xbf16, #tpu.memory_space<vmem>>, %arg3: memref<1x128xf32, #tpu.memory_space<vmem>>, %arg4: memref<128x128xbf16, #tpu.memory_space<vmem>>, %arg5: memref<1x128xf32, #tpu.memory_space<vmem>>, %arg6: memref<128x128xbf16, #tpu.memory_space<vmem>>, %arg7: memref<1x128xf32, #tpu.memory_space<vmem>>, %arg8: memref<8x128xf32, #tpu.memory_space<vmem>>, %arg9: memref<8x128xbf16, #tpu.memory_space<vmem>>, %arg10: memref<8x128xbf16, #tpu.memory_space<vmem>>) attributes {dimension_semantics = [#tpu.dimension_semantics<parallel>], iteration_bounds = array<i64: 1>, scalar_prefetch = 0 : i64, scratch_operands = 2 : i64, tpu.core_type = #tpu.core_type<tc>, window_params = [{transform_indices = @transform_0, window_bounds = array<i64: 8, 128>}, {pipeline_mode = #tpu.pipeline_mode<synchronous>, transform_indices = @transform_1, window_bounds = array<i64: 128, 128>}, {pipeline_mode = #tpu.pipeline_mode<synchronous>, transform_indices = @transform_2, window_bounds = array<i64: 1, 128>}, {pipeline_mode = #tpu.pipeline_mode<synchronous>, transform_indices = @transform_3, window_bounds = array<i64: 128, 128>}, {pipeline_mode = #tpu.pipeline_mode<synchronous>, transform_indices = @transform_4, window_bounds = array<i64: 1, 128>}, {pipeline_mode = #tpu.pipeline_mode<synchronous>, transform_indices = @transform_5, window_bounds = array<i64: 128, 128>}, {pipeline_mode = #tpu.pipeline_mode<synchronous>, transform_indices = @transform_6, window_bounds = array<i64: 1, 128>}, {transform_indices = @transform_7, window_bounds = array<i64: 8, 128>}]} {
    %c0 = arith.constant 0 : index
    %c0_0 = arith.constant 0 : index
    %0 = vector.load %arg1[%c0, %c0_0] : memref<8x128xf32, #tpu.memory_space<vmem>>, vector<8x128xf32>
    %1 = arith.truncf %0 : vector<8x128xf32> to vector<8x128xbf16>
    %c0_1 = arith.constant 0 : index
    %c0_2 = arith.constant 0 : index
    %2 = vector.load %arg2[%c0_1, %c0_2] : memref<128x128xbf16, #tpu.memory_space<vmem>>, vector<128x128xbf16>
    %cst = arith.constant dense<0.000000e+00> : vector<8x128xf32>
    %3 = tpu.matmul %1, %2, %cst {dimension_numbers = #tpu.dot_dimension_numbers<[1], [0], [0], [1], [0, 0, 1, 1], [], []>} : vector<8x128xbf16>, vector<128x128xbf16>, vector<8x128xf32> -> vector<8x128xf32>
    %c0_3 = arith.constant 0 : index
    %c0_4 = arith.constant 0 : index
    %4 = vector.load %arg3[%c0_3, %c0_4] : memref<1x128xf32, #tpu.memory_space<vmem>>, vector<1x128xf32>
    %5 = vector.broadcast %4 : vector<1x128xf32> to vector<8x128xf32>
    %6 = arith.addf %3, %5 : vector<8x128xf32>
    %cst_5 = arith.constant 0.000000e+00 : f32
    %7 = vector.broadcast %cst_5 : f32 to vector<8x128xf32>
    %8 = arith.maximumf %6, %7 : vector<8x128xf32>
    %9 = arith.truncf %8 : vector<8x128xf32> to vector<8x128xbf16>
    %c0_6 = arith.constant 0 : index
    %c0_7 = arith.constant 0 : index
    %10 = vector.load %arg9[%c0_6, %c0_7] : memref<8x128xbf16, #tpu.memory_space<vmem>>, vector<8x128xbf16>
    tpu.vector_store %arg9[%c0_6, %c0_7], %9 {strides = array<i32>} : memref<8x128xbf16, #tpu.memory_space<vmem>>, vector<8x128xbf16>,
    %c0_8 = arith.constant 0 : index
    %c0_9 = arith.constant 0 : index
    %11 = vector.load %arg9[%c0_8, %c0_9] : memref<8x128xbf16, #tpu.memory_space<vmem>>, vector<8x128xbf16>
    %c0_10 = arith.constant 0 : index
    %c0_11 = arith.constant 0 : index
    %12 = vector.load %arg4[%c0_10, %c0_11] : memref<128x128xbf16, #tpu.memory_space<vmem>>, vector<128x128xbf16>
    %cst_12 = arith.constant dense<0.000000e+00> : vector<8x128xf32>
    %13 = tpu.matmul %11, %12, %cst_12 {dimension_numbers = #tpu.dot_dimension_numbers<[1], [0], [0], [1], [0, 0, 1, 1], [], []>} : vector<8x128xbf16>, vector<128x128xbf16>, vector<8x128xf32> -> vector<8x128xf32>
    %c0_13 = arith.constant 0 : index
    %c0_14 = arith.constant 0 : index
    %14 = vector.load %arg5[%c0_13, %c0_14] : memref<1x128xf32, #tpu.memory_space<vmem>>, vector<1x128xf32>
    %15 = vector.broadcast %14 : vector<1x128xf32> to vector<8x128xf32>
    %16 = arith.addf %13, %15 : vector<8x128xf32>
    %cst_15 = arith.constant 0.000000e+00 : f32
    %17 = vector.broadcast %cst_15 : f32 to vector<8x128xf32>
    %18 = arith.maximumf %16, %17 : vector<8x128xf32>
    %19 = arith.truncf %18 : vector<8x128xf32> to vector<8x128xbf16>
    %c0_16 = arith.constant 0 : index
    %c0_17 = arith.constant 0 : index
    %20 = vector.load %arg10[%c0_16, %c0_17] : memref<8x128xbf16, #tpu.memory_space<vmem>>, vector<8x128xbf16>
    tpu.vector_store %arg10[%c0_16, %c0_17], %19 {strides = array<i32>} : memref<8x128xbf16, #tpu.memory_space<vmem>>, vector<8x128xbf16>,
    %c0_18 = arith.constant 0 : index
    %c0_19 = arith.constant 0 : index
    %21 = vector.load %arg10[%c0_18, %c0_19] : memref<8x128xbf16, #tpu.memory_space<vmem>>, vector<8x128xbf16>
    %c0_20 = arith.constant 0 : index
    %c0_21 = arith.constant 0 : index
    %22 = vector.load %arg6[%c0_20, %c0_21] : memref<128x128xbf16, #tpu.memory_space<vmem>>, vector<128x128xbf16>
    %cst_22 = arith.constant dense<0.000000e+00> : vector<8x128xf32>
    %23 = tpu.matmul %21, %22, %cst_22 {dimension_numbers = #tpu.dot_dimension_numbers<[1], [0], [0], [1], [0, 0, 1, 1], [], []>} : vector<8x128xbf16>, vector<128x128xbf16>, vector<8x128xf32> -> vector<8x128xf32>
    %c0_23 = arith.constant 0 : index
    %c0_24 = arith.constant 0 : index
    %24 = vector.load %arg7[%c0_23, %c0_24] : memref<1x128xf32, #tpu.memory_space<vmem>>, vector<1x128xf32>
    %25 = vector.broadcast %24 : vector<1x128xf32> to vector<8x128xf32>
    %26 = arith.addf %23, %25 : vector<8x128xf32>
    %c0_25 = arith.constant 0 : index
    %c0_26 = arith.constant 0 : index
    %27 = vector.load %arg8[%c0_25, %c0_26] : memref<8x128xf32, #tpu.memory_space<vmem>>, vector<8x128xf32>
    tpu.vector_store %arg8[%c0_25, %c0_26], %26 {strides = array<i32>} : memref<8x128xf32, #tpu.memory_space<vmem>>, vector<8x128xf32>,
    return
  }
  func.func @transform_0(%arg0: i32) -> (i32, i32) {
    %c0_i32 = arith.constant 0 : i32
    %c0_i32_0 = arith.constant 0 : i32
    return %arg0, %c0_i32 : i32, i32
  }
  func.func @transform_1(%arg0: i32) -> (i32, i32) {
    %c0_i32 = arith.constant 0 : i32
    %c0_i32_0 = arith.constant 0 : i32
    %c0_i32_1 = arith.constant 0 : i32
    return %c0_i32, %c0_i32_0 : i32, i32
  }
  func.func @transform_2(%arg0: i32) -> (i32, i32) {
    %c0_i32 = arith.constant 0 : i32
    %c0_i32_0 = arith.constant 0 : i32
    %c0_i32_1 = arith.constant 0 : i32
    return %c0_i32, %c0_i32_0 : i32, i32
  }
  func.func @transform_3(%arg0: i32) -> (i32, i32) {
    %c0_i32 = arith.constant 0 : i32
    %c0_i32_0 = arith.constant 0 : i32
    %c0_i32_1 = arith.constant 0 : i32
    return %c0_i32, %c0_i32_0 : i32, i32
  }
  func.func @transform_4(%arg0: i32) -> (i32, i32) {
    %c0_i32 = arith.constant 0 : i32
    %c0_i32_0 = arith.constant 0 : i32
    %c0_i32_1 = arith.constant 0 : i32
    return %c0_i32, %c0_i32_0 : i32, i32
  }
  func.func @transform_5(%arg0: i32) -> (i32, i32) {
    %c0_i32 = arith.constant 0 : i32
    %c0_i32_0 = arith.constant 0 : i32
    %c0_i32_1 = arith.constant 0 : i32
    return %c0_i32, %c0_i32_0 : i32, i32
  }
  func.func @transform_6(%arg0: i32) -> (i32, i32) {
    %c0_i32 = arith.constant 0 : i32
    %c0_i32_0 = arith.constant 0 : i32
    %c0_i32_1 = arith.constant 0 : i32
    return %c0_i32, %c0_i32_0 : i32, i32
  }
  func.func @transform_7(%arg0: i32) -> (i32, i32) {
    %c0_i32 = arith.constant 0 : i32
    %c0_i32_0 = arith.constant 0 : i32
    return %arg0, %c0_i32 : i32, i32
  }
}

</mosaic_0001>

<llo_original>
// kernel: tpu_custom_call.1
$region0: #{tpu_custom_call.1}
  #allocation0 [shape = 'u32[]', space=smem, size = 0x4, offset = 0x4, fixed_abs, tag = 'smem constant byte address 0x4 - core index']
  #allocation1 [shape = 'u32[144,128]{1,0:T(1,128)}', space=vmem, size = 0x12000, scoped, tag = 'internal scratch']
  #allocation2 [shape = 'bf16[8,128]{1,0:T(8,128)(2,1)}', space=vmem, size = 0x800, scoped, tag = 'scratch operand']
  #allocation3 [shape = 'bf16[8,128]{1,0:T(8,128)(2,1)}', space=vmem, size = 0x800, scoped, tag = 'scratch operand']
  %s0 = inlined_call_operand.hbm [shape: f32[8,128], index: 0, kind: input, shape index: {}]
  %s1 = inlined_call_operand.hbm [shape: bf16[128,128], index: 1, kind: input, shape index: {}]
  %s2 = inlined_call_operand.vmem [shape: f32[1,128], index: 2, kind: input, shape index: {}]
  %s3 = inlined_call_operand.hbm [shape: bf16[128,128], index: 3, kind: input, shape index: {}]
  %s4 = inlined_call_operand.vmem [shape: f32[1,128], index: 4, kind: input, shape index: {}]
  %s5 = inlined_call_operand.hbm [shape: bf16[128,128], index: 5, kind: input, shape index: {}]
  %s6 = inlined_call_operand.vmem [shape: f32[1,128], index: 6, kind: input, shape index: {}]
  %s7 = inlined_call_operand.hbm [shape: f32[8,128], index: 7, kind: output, shape index: {}]
  %s8 = sld [smem:[#allocation0]]
  $region54: #{tpu_custom_call.1} parent=0
    _
  %s10 = ssub.s32 1, %s8
  %s11 = scalar_select 0, %s10, %s8
  $region1: #{tpu_custom_call.1} parent=0
    #allocation4 [shape = 'u8[4096]{0}', space=vmem, size = 0x1000, scoped, tag = 'input window, operand 0, single buffered']
    #allocation5 [shape = 's32[1]{0}', space=sflag, size = 0x4, scoped, tag = 'scoped memory for tpu_custom_call.1']
    #allocation6 [shape = 's32[1]{0}', space=sflag, size = 0x4, scoped, tag = 'scoped memory for tpu_custom_call.1']
    #allocation7 [shape = 'u8[32768]{0}', space=vmem, size = 0x8000, scoped, tag = 'input window, operand 1, single buffered']
    #allocation8 [shape = 's32[1]{0}', space=sflag, size = 0x4, scoped, tag = 'scoped memory for tpu_custom_call.1']
    #allocation9 [shape = 'u8[32768]{0}', space=vmem, size = 0x8000, scoped, tag = 'input window, operand 3, single buffered']
    #allocation10 [shape = 'u8[32768]{0}', space=vmem, size = 0x8000, scoped, tag = 'input window, operand 5, single buffered']
    #allocation11 [shape = 's32[1]{0}', space=sflag, size = 0x4, scoped, tag = 'scoped memory for tpu_custom_call.1']
    #allocation12 [shape = 'u8[4096]{0}', space=vmem, size = 0x1000, scoped, tag = 'output window, operand 0, single buffered']
    %12 = vsyncpa [#allocation5], 0
    %13 = vsyncpa [#allocation8], 0
    %14 = vsyncpa [#allocation11], 0
    %15 = vsyncpa [#allocation6], 0
    // Predicated region
    $region2: #{tpu_custom_call.1} parent=1 // pred_check
      _
    $region3: #{tpu_custom_call.1} parent=1 // pred_check_branch
      %17 = sbr.rel (0) target = $region5
    $region4: #{tpu_custom_call.1} parent=1 // pred_region
      %s19 = ssub.s32 128, 128
      %20 = vsyncadd [#allocation5], %s19
      %s22 = sshll.u32 [#allocation4], 4
      %s23 = int_to_ptr.vmem [resolvable:$true] %s22
      %25 = dma.hbm_to_vmem [thread:$0]  %s0, 128, %s23, [#allocation5]
    $region5: #{tpu_custom_call.1} parent=1 // pred_fallthru
      _
    // Predicated region
    $region6: #{tpu_custom_call.1} parent=1 // pred_check
      _
    $region7: #{tpu_custom_call.1} parent=1 // pred_check_branch
      %27 = sbr.rel (0) target = $region9
    $region8: #{tpu_custom_call.1} parent=1 // pred_region
      %s29 = ssub.s32 1024, 1024
      %30 = vsyncadd [#allocation8], %s29
      %s31 = sshll.u32 [#allocation7], 4
      %s32 = int_to_ptr.vmem [resolvable:$true] %s31
      %37 = dma.hbm_to_vmem [thread:$0]  %s1, 1024, %s32, [#allocation8], 64, 64, 4
    $region9: #{tpu_custom_call.1} parent=1 // pred_fallthru
      _
    // Predicated region
    $region10: #{tpu_custom_call.1} parent=1 // pred_check
      _
    $region11: #{tpu_custom_call.1} parent=1 // pred_check_branch
      %39 = sbr.rel (0) target = $region13
    $region12: #{tpu_custom_call.1} parent=1 // pred_region
      _
    $region13: #{tpu_custom_call.1} parent=1 // pred_fallthru
      _
    // Predicated region
    $region14: #{tpu_custom_call.1} parent=1 // pred_check
      _
    $region15: #{tpu_custom_call.1} parent=1 // pred_check_branch
      %41 = sbr.rel (0) target = $region17
    $region16: #{tpu_custom_call.1} parent=1 // pred_region
      %s43 = ssub.s32 1024, 1024
      %44 = vsyncadd [#allocation8], %s43
      %s45 = sshll.u32 [#allocation9], 4
      %s46 = int_to_ptr.vmem [resolvable:$true] %s45
      %51 = dma.hbm_to_vmem [thread:$0]  %s3, 1024, %s46, [#allocation8], 64, 64, 4
    $region17: #{tpu_custom_call.1} parent=1 // pred_fallthru
      _
    // Predicated region
    $region18: #{tpu_custom_call.1} parent=1 // pred_check
      _
    $region19: #{tpu_custom_call.1} parent=1 // pred_check_branch
      %53 = sbr.rel (0) target = $region21
    $region20: #{tpu_custom_call.1} parent=1 // pred_region
      _
    $region21: #{tpu_custom_call.1} parent=1 // pred_fallthru
      _
    // Predicated region
    $region22: #{tpu_custom_call.1} parent=1 // pred_check
      _
    $region23: #{tpu_custom_call.1} parent=1 // pred_check_branch
      %55 = sbr.rel (0) target = $region25
    $region24: #{tpu_custom_call.1} parent=1 // pred_region
      %s57 = ssub.s32 1024, 1024
      %58 = vsyncadd [#allocation11], %s57
      %s59 = sshll.u32 [#allocation10], 4
      %s60 = int_to_ptr.vmem [resolvable:$true] %s59
      %65 = dma.hbm_to_vmem [thread:$0]  %s5, 1024, %s60, [#allocation11], 64, 64, 4
    $region25: #{tpu_custom_call.1} parent=1 // pred_fallthru
      _
    // Predicated region
    $region26: #{tpu_custom_call.1} parent=1 // pred_check
      _
    $region27: #{tpu_custom_call.1} parent=1 // pred_check_branch
      %67 = sbr.rel (0) target = $region29
    $region28: #{tpu_custom_call.1} parent=1 // pred_region
      _
    $region29: #{tpu_custom_call.1} parent=1 // pred_fallthru
      _
    // Predicated region
    $region30: #{tpu_custom_call.1} parent=1 // pred_check
      _
    $region31: #{tpu_custom_call.1} parent=1 // pred_check_branch
      %69 = sbr.rel (0) target = $region33
    $region32: #{tpu_custom_call.1} parent=1 // pred_region
      %70 = dma.done [#allocation5], 128
    $region33: #{tpu_custom_call.1} parent=1 // pred_fallthru
      _
    // Predicated region
    $region34: #{tpu_custom_call.1} parent=1 // pred_check
      _
    $region35: #{tpu_custom_call.1} parent=1 // pred_check_branch
      %72 = sbr.rel (0) target = $region37
    $region36: #{tpu_custom_call.1} parent=1 // pred_region
      %73 = dma.done [#allocation8], 1024
    $region37: #{tpu_custom_call.1} parent=1 // pred_fallthru
      _
    // Predicated region
    $region38: #{tpu_custom_call.1} parent=1 // pred_check
      _
    $region39: #{tpu_custom_call.1} parent=1 // pred_check_branch
      %75 = sbr.rel (0) target = $region41
    $region40: #{tpu_custom_call.1} parent=1 // pred_region
      %76 = dma.done [#allocation8], 1024
    $region41: #{tpu_custom_call.1} parent=1 // pred_fallthru
      _
    // Predicated region
    $region42: #{tpu_custom_call.1} parent=1 // pred_check
      _
    $region43: #{tpu_custom_call.1} parent=1 // pred_check_branch
      %78 = sbr.rel (0) target = $region45
    $region44: #{tpu_custom_call.1} parent=1 // pred_region
      %79 = dma.done [#allocation11], 1024
    $region45: #{tpu_custom_call.1} parent=1 // pred_fallthru
      _
    %v81 = vld [vmem:[#allocation4] sm:$0xff]
    %v82 = vpack.c.bf16 %v81, %v81
    %v83 = vld [vmem:[#allocation7] sm:$0xf]
    %v84 = vld [vmem:[#allocation7 + $0x4] sm:$0xf]
    %v85 = vld [vmem:[#allocation7 + $0x8] sm:$0xf]
    %v86 = vld [vmem:[#allocation7 + $0xc] sm:$0xf]
    %v87 = vld [vmem:[#allocation7 + $0x10] sm:$0xf]
    %v88 = vld [vmem:[#allocation7 + $0x14] sm:$0xf]
    %v89 = vld [vmem:[#allocation7 + $0x18] sm:$0xf]
    %v90 = vld [vmem:[#allocation7 + $0x1c] sm:$0xf]
    %v91 = vld [vmem:[#allocation7 + $0x20] sm:$0xf]
    %v92 = vld [vmem:[#allocation7 + $0x24] sm:$0xf]
    %v93 = vld [vmem:[#allocation7 + $0x28] sm:$0xf]
    %v94 = vld [vmem:[#allocation7 + $0x2c] sm:$0xf]
    %v95 = vld [vmem:[#allocation7 + $0x30] sm:$0xf]
    %v96 = vld [vmem:[#allocation7 + $0x34] sm:$0xf]
    %v97 = vld [vmem:[#allocation7 + $0x38] sm:$0xf]
    %v98 = vld [vmem:[#allocation7 + $0x3c] sm:$0xf]
    %v99 = vld [vmem:[%s2] sm:$0x1]
    %v101 = vlaneseq
    %v102 = vshrl.u32 %v101, 7
    %v103 = vsub.s32 0, %v102
    %v104 = vrot.slane %v99, %v103
    %v122 = vunpack.c.l.b16 %v83
    %v123 = vunpack.c.l.b16 %v84
    %v124 = vunpack.c.l.b16 %v85
    %v125 = vunpack.c.l.b16 %v86
    %v126 = vunpack.c.l.b16 %v87
    %v127 = vunpack.c.l.b16 %v88
    %v128 = vunpack.c.l.b16 %v89
    %v129 = vunpack.c.l.b16 %v90
    %v130 = vunpack.c.l.b16 %v91
    %v131 = vunpack.c.l.b16 %v92
    %v132 = vunpack.c.l.b16 %v93
    %v133 = vunpack.c.l.b16 %v94
    %v134 = vunpack.c.l.b16 %v95
    %v135 = vunpack.c.l.b16 %v96
    %v136 = vunpack.c.l.b16 %v97
    %v137 = vunpack.c.l.b16 %v98
    %v138 = vpack.c.b16 %v123, %v122
    %v139 = vpack.c.b16 %v125, %v124
    %v140 = vpack.c.b16 %v127, %v126
    %v141 = vpack.c.b16 %v129, %v128
    %v142 = vpack.c.b16 %v131, %v130
    %v143 = vpack.c.b16 %v133, %v132
    %v144 = vpack.c.b16 %v135, %v134
    %v145 = vpack.c.b16 %v137, %v136
    %154 = vmatprep.subr.bf16.mxu0 0
    %155 = vmatpush1.bf16.msra.mxu0 %v138
    %156 = vmatprep.subr.bf16.mxu0 0
    %157 = vmatpush1.bf16.msra.mxu0 %v139
    %158 = vmatprep.subr.bf16.mxu0 0
    %159 = vmatpush1.bf16.msra.mxu0 %v140
    %160 = vmatprep.subr.bf16.mxu0 0
    %161 = vmatpush1.bf16.msra.mxu0 %v141
    %162 = vmatprep.subr.bf16.mxu0 0
    %163 = vmatpush1.bf16.msra.mxu0 %v142
    %164 = vmatprep.subr.bf16.mxu0 0
    %165 = vmatpush1.bf16.msra.mxu0 %v143
    %166 = vmatprep.subr.bf16.mxu0 0
    %167 = vmatpush1.bf16.msra.mxu0 %v144
    %168 = vmatprep.subr.bf16.mxu0 0
    %169 = vmatpush1.bf16.msra.mxu0 %v145
    %170 = vmatprep.subr.bf16.mxu0 0
    %171 = vmatpush1.bf16.msra.mxu0 0
    %172 = vmatprep.subr.bf16.mxu0 0
    %173 = vmatpush1.bf16.msra.mxu0 0
    %174 = vmatprep.subr.bf16.mxu0 0
    %175 = vmatpush1.bf16.msra.mxu0 0
    %176 = vmatprep.subr.bf16.mxu0 0
    %177 = vmatpush1.bf16.msra.mxu0 0
    %178 = vmatprep.subr.bf16.mxu0 0
    %179 = vmatpush1.bf16.msra.mxu0 0
    %180 = vmatprep.subr.bf16.mxu0 0
    %181 = vmatpush1.bf16.msra.mxu0 0
    %182 = vmatprep.subr.bf16.mxu0 0
    %183 = vmatpush1.bf16.msra.mxu0 0
    %184 = vmatprep.subr.bf16.mxu0 0
    %185 = vmatpush1.bf16.msra.mxu0 0
    %186 = vmatprep.mubr.bf16.mxu0 0
    %187 = vmatmul.mubr.bf16.gmra.mrb[0].mxu0 %v82
    %v188 = vpop.f32.mrb[0].mxu0
    %v189 = vadd.f32 %v104, %v188
    %v190 = vpop.f32.mrb[0].mxu0
    %v191 = vpop.f32.mrb[0].mxu0
    %v192 = vpop.f32.mrb[0].mxu0
    %193 = vdwg.mxu0
    %v194 = vmax.f32 %v189, 0.0
    %v195 = vpack.c.bf16 %v194, %v194
    %196 = vst [vmem:[#allocation2] sm:$0xf] %v195
    %v197 = vld [vmem:[#allocation2] sm:$0xf]
    %v198 = vld [vmem:[#allocation9] sm:$0xf]
    %v199 = vld [vmem:[#allocation9 + $0x4] sm:$0xf]
    %v200 = vld [vmem:[#allocation9 + $0x8] sm:$0xf]
    %v201 = vld [vmem:[#allocation9 + $0xc] sm:$0xf]
    %v202 = vld [vmem:[#allocation9 + $0x10] sm:$0xf]
    %v203 = vld [vmem:[#allocation9 + $0x14] sm:$0xf]
    %v204 = vld [vmem:[#allocation9 + $0x18] sm:$0xf]
    %v205 = vld [vmem:[#allocation9 + $0x1c] sm:$0xf]
    %v206 = vld [vmem:[#allocation9 + $0x20] sm:$0xf]
    %v207 = vld [vmem:[#allocation9 + $0x24] sm:$0xf]
    %v208 = vld [vmem:[#allocation9 + $0x28] sm:$0xf]
    %v209 = vld [vmem:[#allocation9 + $0x2c] sm:$0xf]
    %v210 = vld [vmem:[#allocation9 + $0x30] sm:$0xf]
    %v211 = vld [vmem:[#allocation9 + $0x34] sm:$0xf]
    %v212 = vld [vmem:[#allocation9 + $0x38] sm:$0xf]
    %v213 = vld [vmem:[#allocation9 + $0x3c] sm:$0xf]
    %v214 = vld [vmem:[%s4] sm:$0x1]
    %v216 = vlaneseq
    %v217 = vshrl.u32 %v216, 7
    %v218 = vsub.s32 0, %v217
    %v219 = vrot.slane %v214, %v218
    %v237 = vunpack.c.l.b16 %v198
    %v238 = vunpack.c.l.b16 %v199
    %v239 = vunpack.c.l.b16 %v200
    %v240 = vunpack.c.l.b16 %v201
    %v241 = vunpack.c.l.b16 %v202
    %v242 = vunpack.c.l.b16 %v203
    %v243 = vunpack.c.l.b16 %v204
    %v244 = vunpack.c.l.b16 %v205
    %v245 = vunpack.c.l.b16 %v206
    %v246 = vunpack.c.l.b16 %v207
    %v247 = vunpack.c.l.b16 %v208
    %v248 = vunpack.c.l.b16 %v209
    %v249 = vunpack.c.l.b16 %v210
    %v250 = vunpack.c.l.b16 %v211
    %v251 = vunpack.c.l.b16 %v212
    %v252 = vunpack.c.l.b16 %v213
    %v253 = vpack.c.b16 %v238, %v237
    %v254 = vpack.c.b16 %v240, %v239
    %v255 = vpack.c.b16 %v242, %v241
    %v256 = vpack.c.b16 %v244, %v243
    %v257 = vpack.c.b16 %v246, %v245
    %v258 = vpack.c.b16 %v248, %v247
    %v259 = vpack.c.b16 %v250, %v249
    %v260 = vpack.c.b16 %v252, %v251
    %269 = vmatprep.subr.bf16.mxu0 0
    %270 = vmatpush1.bf16.msra.mxu0 %v253
    %271 = vmatprep.subr.bf16.mxu0 0
    %272 = vmatpush1.bf16.msra.mxu0 %v254
    %273 = vmatprep.subr.bf16.mxu0 0
    %274 = vmatpush1.bf16.msra.mxu0 %v255
    %275 = vmatprep.subr.bf16.mxu0 0
    %276 = vmatpush1.bf16.msra.mxu0 %v256
    %277 = vmatprep.subr.bf16.mxu0 0
    %278 = vmatpush1.bf16.msra.mxu0 %v257
    %279 = vmatprep.subr.bf16.mxu0 0
    %280 = vmatpush1.bf16.msra.mxu0 %v258
    %281 = vmatprep.subr.bf16.mxu0 0
    %282 = vmatpush1.bf16.msra.mxu0 %v259
    %283 = vmatprep.subr.bf16.mxu0 0
    %284 = vmatpush1.bf16.msra.mxu0 %v260
    %285 = vmatprep.subr.bf16.mxu0 0
    %286 = vmatpush1.bf16.msra.mxu0 0
    %287 = vmatprep.subr.bf16.mxu0 0
    %288 = vmatpush1.bf16.msra.mxu0 0
    %289 = vmatprep.subr.bf16.mxu0 0
    %290 = vmatpush1.bf16.msra.mxu0 0
    %291 = vmatprep.subr.bf16.mxu0 0
    %292 = vmatpush1.bf16.msra.mxu0 0
    %293 = vmatprep.subr.bf16.mxu0 0
    %294 = vmatpush1.bf16.msra.mxu0 0
    %295 = vmatprep.subr.bf16.mxu0 0
    %296 = vmatpush1.bf16.msra.mxu0 0
    %297 = vmatprep.subr.bf16.mxu0 0
    %298 = vmatpush1.bf16.msra.mxu0 0
    %299 = vmatprep.subr.bf16.mxu0 0
    %300 = vmatpush1.bf16.msra.mxu0 0
    %301 = vmatprep.mubr.bf16.mxu0 0
    %302 = vmatmul.mubr.bf16.gmra.mrb[0].mxu0 %v197
    %v303 = vpop.f32.mrb[0].mxu0
    %v304 = vadd.f32 %v219, %v303
    %v305 = vpop.f32.mrb[0].mxu0
    %v306 = vpop.f32.mrb[0].mxu0
    %v307 = vpop.f32.mrb[0].mxu0
    %308 = vdwg.mxu0
    %v309 = vmax.f32 %v304, 0.0
    %v310 = vpack.c.bf16 %v309, %v309
    %311 = vst [vmem:[#allocation3] sm:$0xf] %v310
    %v312 = vld [vmem:[#allocation3] sm:$0xf]
    %v313 = vld [vmem:[#allocation10] sm:$0xf]
    %v314 = vld [vmem:[#allocation10 + $0x4] sm:$0xf]
    %v315 = vld [vmem:[#allocation10 + $0x8] sm:$0xf]
    %v316 = vld [vmem:[#allocation10 + $0xc] sm:$0xf]
    %v317 = vld [vmem:[#allocation10 + $0x10] sm:$0xf]
    %v318 = vld [vmem:[#allocation10 + $0x14] sm:$0xf]
    %v319 = vld [vmem:[#allocation10 + $0x18] sm:$0xf]
    %v320 = vld [vmem:[#allocation10 + $0x1c] sm:$0xf]
    %v321 = vld [vmem:[#allocation10 + $0x20] sm:$0xf]
    %v322 = vld [vmem:[#allocation10 + $0x24] sm:$0xf]
    %v323 = vld [vmem:[#allocation10 + $0x28] sm:$0xf]
    %v324 = vld [vmem:[#allocation10 + $0x2c] sm:$0xf]
    %v325 = vld [vmem:[#allocation10 + $0x30] sm:$0xf]
    %v326 = vld [vmem:[#allocation10 + $0x34] sm:$0xf]
    %v327 = vld [vmem:[#allocation10 + $0x38] sm:$0xf]
    %v328 = vld [vmem:[#allocation10 + $0x3c] sm:$0xf]
    %v329 = vld [vmem:[%s6] sm:$0x1]
    %v331 = vlaneseq
    %v332 = vshrl.u32 %v331, 7
    %v333 = vsub.s32 0, %v332
    %v334 = vrot.slane %v329, %v333
    %v352 = vunpack.c.l.b16 %v313
    %v353 = vunpack.c.l.b16 %v314
    %v354 = vunpack.c.l.b16 %v315
    %v355 = vunpack.c.l.b16 %v316
    %v356 = vunpack.c.l.b16 %v317
    %v357 = vunpack.c.l.b16 %v318
    %v358 = vunpack.c.l.b16 %v319
    %v359 = vunpack.c.l.b16 %v320
    %v360 = vunpack.c.l.b16 %v321
    %v361 = vunpack.c.l.b16 %v322
    %v362 = vunpack.c.l.b16 %v323
    %v363 = vunpack.c.l.b16 %v324
    %v364 = vunpack.c.l.b16 %v325
    %v365 = vunpack.c.l.b16 %v326
    %v366 = vunpack.c.l.b16 %v327
    %v367 = vunpack.c.l.b16 %v328
    %v368 = vpack.c.b16 %v353, %v352
    %v369 = vpack.c.b16 %v355, %v354
    %v370 = vpack.c.b16 %v357, %v356
    %v371 = vpack.c.b16 %v359, %v358
    %v372 = vpack.c.b16 %v361, %v360
    %v373 = vpack.c.b16 %v363, %v362
    %v374 = vpack.c.b16 %v365, %v364
    %v375 = vpack.c.b16 %v367, %v366
    %384 = vmatprep.subr.bf16.mxu0 0
    %385 = vmatpush1.bf16.msra.mxu0 %v368
    %386 = vmatprep.subr.bf16.mxu0 0
    %387 = vmatpush1.bf16.msra.mxu0 %v369
    %388 = vmatprep.subr.bf16.mxu0 0
    %389 = vmatpush1.bf16.msra.mxu0 %v370
    %390 = vmatprep.subr.bf16.mxu0 0
    %391 = vmatpush1.bf16.msra.mxu0 %v371
    %392 = vmatprep.subr.bf16.mxu0 0
    %393 = vmatpush1.bf16.msra.mxu0 %v372
    %394 = vmatprep.subr.bf16.mxu0 0
    %395 = vmatpush1.bf16.msra.mxu0 %v373
    %396 = vmatprep.subr.bf16.mxu0 0
    %397 = vmatpush1.bf16.msra.mxu0 %v374
    %398 = vmatprep.subr.bf16.mxu0 0
    %399 = vmatpush1.bf16.msra.mxu0 %v375
    %400 = vmatprep.subr.bf16.mxu0 0
    %401 = vmatpush1.bf16.msra.mxu0 0
    %402 = vmatprep.subr.bf16.mxu0 0
    %403 = vmatpush1.bf16.msra.mxu0 0
    %404 = vmatprep.subr.bf16.mxu0 0
    %405 = vmatpush1.bf16.msra.mxu0 0
    %406 = vmatprep.subr.bf16.mxu0 0
    %407 = vmatpush1.bf16.msra.mxu0 0
    %408 = vmatprep.subr.bf16.mxu0 0
    %409 = vmatpush1.bf16.msra.mxu0 0
    %410 = vmatprep.subr.bf16.mxu0 0
    %411 = vmatpush1.bf16.msra.mxu0 0
    %412 = vmatprep.subr.bf16.mxu0 0
    %413 = vmatpush1.bf16.msra.mxu0 0
    %414 = vmatprep.subr.bf16.mxu0 0
    %415 = vmatpush1.bf16.msra.mxu0 0
    %416 = vmatprep.mubr.bf16.mxu0 0
    %417 = vmatmul.mubr.bf16.gmra.mrb[0].mxu0 %v312
    %v418 = vpop.f32.mrb[0].mxu0
    %v419 = vadd.f32 %v334, %v418
    %v420 = vpop.f32.mrb[0].mxu0
    %v421 = vpop.f32.mrb[0].mxu0
    %v422 = vpop.f32.mrb[0].mxu0
    %423 = vdwg.mxu0
    %424 = vst [vmem:[#allocation12] sm:$0xff] %v419
    // Predicated region
    $region46: #{tpu_custom_call.1} parent=1 // pred_check
      _
    $region47: #{tpu_custom_call.1} parent=1 // pred_check_branch
      %426 = sbr.rel (0) target = $region49
    $region48: #{tpu_custom_call.1} parent=1 // pred_region
      %s428 = ssub.s32 128, 128
      %429 = vsyncadd [#allocation6], %s428
      %s431 = sshll.u32 [#allocation12], 4
      %s432 = int_to_ptr.vmem [resolvable:$true] %s431
      %434 = dma.vmem_to_hbm [thread:$0]  %s432, 128, %s7, [#allocation6]
    $region49: #{tpu_custom_call.1} parent=1 // pred_fallthru
      _
    // Predicated region
    $region50: #{tpu_custom_call.1} parent=1 // pred_check
      _
    $region51: #{tpu_custom_call.1} parent=1 // pred_check_branch
      %436 = sbr.rel (0) target = $region53
    $region52: #{tpu_custom_call.1} parent=1 // pred_region
      %437 = dma.done [#allocation6], 128
    $region53: #{tpu_custom_call.1} parent=1 // pred_fallthru
      _
    %438 = vsyncpa [#allocation5], 1
    %439 = vsyncpa [#allocation8], 1
    %440 = vsyncpa [#allocation11], 1
    %441 = vsyncpa [#allocation6], 1

// kernel: tpu_custom_call.1
$region0: #{tpu_custom_call.1}
  #allocation0 [shape = 'u32[]', space=smem, size = 0x4, offset = 0x4, fixed_abs, tag = 'smem constant byte address 0x4 - core index']
  #allocation1 [shape = 'u32[144,128]{1,0:T(1,128)}', space=vmem, size = 0x12000, scoped, tag = 'internal scratch']
  #allocation2 [shape = 'bf16[8,128]{1,0:T(8,128)(2,1)}', space=vmem, size = 0x800, scoped, tag = 'scratch operand']
  #allocation3 [shape = 'bf16[8,128]{1,0:T(8,128)(2,1)}', space=vmem, size = 0x800, scoped, tag = 'scratch operand']
  %s0 = inlined_call_operand.hbm [shape: f32[8,128], index: 0, kind: input, shape index: {}]
  %s1 = inlined_call_operand.hbm [shape: bf16[128,128], index: 1, kind: input, shape index: {}]
  %s2 = inlined_call_operand.vmem [shape: f32[1,128], index: 2, kind: input, shape index: {}]
  %s3 = inlined_call_operand.hbm [shape: bf16[128,128], index: 3, kind: input, shape index: {}]
  %s4 = inlined_call_operand.vmem [shape: f32[1,128], index: 4, kind: input, shape index: {}]
  %s5 = inlined_call_operand.hbm [shape: bf16[128,128], index: 5, kind: input, shape index: {}]
  %s6 = inlined_call_operand.vmem [shape: f32[1,128], index: 6, kind: input, shape index: {}]
  %s7 = inlined_call_operand.hbm [shape: f32[8,128], index: 7, kind: output, shape index: {}]
  %s8 = sld [smem:[#allocation0]]
  $region54: #{tpu_custom_call.1} parent=0
    _
  %s10 = ssub.s32 1, %s8
  %s11 = scalar_select 0, %s10, %s8
  $region1: #{tpu_custom_call.1} parent=0
    #allocation4 [shape = 'u8[4096]{0}', space=vmem, size = 0x1000, scoped, tag = 'input window, operand 0, single buffered']
    #allocation5 [shape = 's32[1]{0}', space=sflag, size = 0x4, scoped, tag = 'scoped memory for tpu_custom_call.1']
    #allocation6 [shape = 's32[1]{0}', space=sflag, size = 0x4, scoped, tag = 'scoped memory for tpu_custom_call.1']
    #allocation7 [shape = 'u8[32768]{0}', space=vmem, size = 0x8000, scoped, tag = 'input window, operand 1, single buffered']
    #allocation8 [shape = 's32[1]{0}', space=sflag, size = 0x4, scoped, tag = 'scoped memory for tpu_custom_call.1']
    #allocation9 [shape = 'u8[32768]{0}', space=vmem, size = 0x8000, scoped, tag = 'input window, operand 3, single buffered']
    #allocation10 [shape = 'u8[32768]{0}', space=vmem, size = 0x8000, scoped, tag = 'input window, operand 5, single buffered']
    #allocation11 [shape = 's32[1]{0}', space=sflag, size = 0x4, scoped, tag = 'scoped memory for tpu_custom_call.1']
    #allocation12 [shape = 'u8[4096]{0}', space=vmem, size = 0x1000, scoped, tag = 'output window, operand 0, single buffered']
    %12 = vsyncpa [#allocation5], 0
    %13 = vsyncpa [#allocation8], 0
    %14 = vsyncpa [#allocation11], 0
    %15 = vsyncpa [#allocation6], 0
    // Predicated region
    $region2: #{tpu_custom_call.1} parent=1 // pred_check
      _
    $region3: #{tpu_custom_call.1} parent=1 // pred_check_branch
      %17 = sbr.rel (0) target = $region5
    $region4: #{tpu_custom_call.1} parent=1 // pred_region
      %s19 = ssub.s32 128, 128
      %20 = vsyncadd [#allocation5], %s19
      %s22 = sshll.u32 [#allocation4], 4
      %s23 = int_to_ptr.vmem [resolvable:$true] %s22
      %25 = dma.hbm_to_vmem [thread:$0]  %s0, 128, %s23, [#allocation5]
    $region5: #{tpu_custom_call.1} parent=1 // pred_fallthru
      _
    // Predicated region
    $region6: #{tpu_custom_call.1} parent=1 // pred_check
      _
    $region7: #{tpu_custom_call.1} parent=1 // pred_check_branch
      %27 = sbr.rel (0) target = $region9
    $region8: #{tpu_custom_call.1} parent=1 // pred_region
      %s29 = ssub.s32 1024, 1024
      %30 = vsyncadd [#allocation8], %s29
      %s31 = sshll.u32 [#allocation7], 4
      %s32 = int_to_ptr.vmem [resolvable:$true] %s31
      %37 = dma.hbm_to_vmem [thread:$0]  %s1, 1024, %s32, [#allocation8], 64, 64, 4
    $region9: #{tpu_custom_call.1} parent=1 // pred_fallthru
      _
    // Predicated region
    $region10: #{tpu_custom_call.1} parent=1 // pred_check
      _
    $region11: #{tpu_custom_call.1} parent=1 // pred_check_branch
      %39 = sbr.rel (0) target = $region13
    $region12: #{tpu_custom_call.1} parent=1 // pred_region
      _
    $region13: #{tpu_custom_call.1} parent=1 // pred_fallthru
      _
    // Predicated region
    $region14: #{tpu_custom_call.1} parent=1 // pred_check
      _
    $region15: #{tpu_custom_call.1} parent=1 // pred_check_branch
      %41 = sbr.rel (0) target = $region17
    $region16: #{tpu_custom_call.1} parent=1 // pred_region
      %s43 = ssub.s32 1024, 1024
      %44 = vsyncadd [#allocation8], %s43
      %s45 = sshll.u32 [#allocation9], 4
      %s46 = int_to_ptr.vmem [resolvable:$true] %s45
      %51 = dma.hbm_to_vmem [thread:$0]  %s3, 1024, %s46, [#allocation8], 64, 64, 4
    $region17: #{tpu_custom_call.1} parent=1 // pred_fallthru
      _
    // Predicated region
    $region18: #{tpu_custom_call.1} parent=1 // pred_check
      _
    $region19: #{tpu_custom_call.1} parent=1 // pred_check_branch
      %53 = sbr.rel (0) target = $region21
    $region20: #{tpu_custom_call.1} parent=1 // pred_region
      _
    $region21: #{tpu_custom_call.1} parent=1 // pred_fallthru
      _
    // Predicated region
    $region22: #{tpu_custom_call.1} parent=1 // pred_check
      _
    $region23: #{tpu_custom_call.1} parent=1 // pred_check_branch
      %55 = sbr.rel (0) target = $region25
    $region24: #{tpu_custom_call.1} parent=1 // pred_region
      %s57 = ssub.s32 1024, 1024
      %58 = vsyncadd [#allocation11], %s57
      %s59 = sshll.u32 [#allocation10], 4
      %s60 = int_to_ptr.vmem [resolvable:$true] %s59
      %65 = dma.hbm_to_vmem [thread:$0]  %s5, 1024, %s60, [#allocation11], 64, 64, 4
    $region25: #{tpu_custom_call.1} parent=1 // pred_fallthru
      _
    // Predicated region
    $region26: #{tpu_custom_call.1} parent=1 // pred_check
      _
    $region27: #{tpu_custom_call.1} parent=1 // pred_check_branch
      %67 = sbr.rel (0) target = $region29
    $region28: #{tpu_custom_call.1} parent=1 // pred_region
      _
    $region29: #{tpu_custom_call.1} parent=1 // pred_fallthru
      _
    // Predicated region
    $region30: #{tpu_custom_call.1} parent=1 // pred_check
      _
    $region31: #{tpu_custom_call.1} parent=1 // pred_check_branch
      %69 = sbr.rel (0) target = $region33
    $region32: #{tpu_custom_call.1} parent=1 // pred_region
      %70 = dma.done [#allocation5], 128
    $region33: #{tpu_custom_call.1} parent=1 // pred_fallthru
      _
    // Predicated region
    $region34: #{tpu_custom_call.1} parent=1 // pred_check
      _
    $region35: #{tpu_custom_call.1} parent=1 // pred_check_branch
      %72 = sbr.rel (0) target = $region37
    $region36: #{tpu_custom_call.1} parent=1 // pred_region
      %73 = dma.done [#allocation8], 1024
    $region37: #{tpu_custom_call.1} parent=1 // pred_fallthru
      _
    // Predicated region
    $region38: #{tpu_custom_call.1} parent=1 // pred_check
      _
    $region39: #{tpu_custom_call.1} parent=1 // pred_check_branch
      %75 = sbr.rel (0) target = $region41
    $region40: #{tpu_custom_call.1} parent=1 // pred_region
      %76 = dma.done [#allocation8], 1024
    $region41: #{tpu_custom_call.1} parent=1 // pred_fallthru
      _
    // Predicated region
    $region42: #{tpu_custom_call.1} parent=1 // pred_check
      _
    $region43: #{tpu_custom_call.1} parent=1 // pred_check_branch
      %78 = sbr.rel (0) target = $region45
    $region44: #{tpu_custom_call.1} parent=1 // pred_region
      %79 = dma.done [#allocation11], 1024
    $region45: #{tpu_custom_call.1} parent=1 // pred_fallthru
      _
    %v81 = vld [vmem:[#allocation4] sm:$0xff]
    %v82 = vpack.c.bf16 %v81, %v81
    %v83 = vld [vmem:[#allocation7] sm:$0xf]
    %v84 = vld [vmem:[#allocation7 + $0x4] sm:$0xf]
    %v85 = vld [vmem:[#allocation7 + $0x8] sm:$0xf]
    %v86 = vld [vmem:[#allocation7 + $0xc] sm:$0xf]
    %v87 = vld [vmem:[#allocation7 + $0x10] sm:$0xf]
    %v88 = vld [vmem:[#allocation7 + $0x14] sm:$0xf]
    %v89 = vld [vmem:[#allocation7 + $0x18] sm:$0xf]
    %v90 = vld [vmem:[#allocation7 + $0x1c] sm:$0xf]
    %v91 = vld [vmem:[#allocation7 + $0x20] sm:$0xf]
    %v92 = vld [vmem:[#allocation7 + $0x24] sm:$0xf]
    %v93 = vld [vmem:[#allocation7 + $0x28] sm:$0xf]
    %v94 = vld [vmem:[#allocation7 + $0x2c] sm:$0xf]
    %v95 = vld [vmem:[#allocation7 + $0x30] sm:$0xf]
    %v96 = vld [vmem:[#allocation7 + $0x34] sm:$0xf]
    %v97 = vld [vmem:[#allocation7 + $0x38] sm:$0xf]
    %v98 = vld [vmem:[#allocation7 + $0x3c] sm:$0xf]
    %v99 = vld [vmem:[%s2] sm:$0x1]
    %v101 = vlaneseq
    %v102 = vshrl.u32 %v101, 7
    %v103 = vsub.s32 0, %v102
    %v104 = vrot.slane %v99, %v103
    %v122 = vunpack.c.l.b16 %v83
    %v123 = vunpack.c.l.b16 %v84
    %v124 = vunpack.c.l.b16 %v85
    %v125 = vunpack.c.l.b16 %v86
    %v126 = vunpack.c.l.b16 %v87
    %v127 = vunpack.c.l.b16 %v88
    %v128 = vunpack.c.l.b16 %v89
    %v129 = vunpack.c.l.b16 %v90
    %v130 = vunpack.c.l.b16 %v91
    %v131 = vunpack.c.l.b16 %v92
    %v132 = vunpack.c.l.b16 %v93
    %v133 = vunpack.c.l.b16 %v94
    %v134 = vunpack.c.l.b16 %v95
    %v135 = vunpack.c.l.b16 %v96
    %v136 = vunpack.c.l.b16 %v97
    %v137 = vunpack.c.l.b16 %v98
    %v138 = vpack.c.b16 %v123, %v122
    %v139 = vpack.c.b16 %v125, %v124
    %v140 = vpack.c.b16 %v127, %v126
    %v141 = vpack.c.b16 %v129, %v128
    %v142 = vpack.c.b16 %v131, %v130
    %v143 = vpack.c.b16 %v133, %v132
    %v144 = vpack.c.b16 %v135, %v134
    %v145 = vpack.c.b16 %v137, %v136
    %154 = vmatprep.subr.bf16.mxu0 0
    %155 = vmatpush1.bf16.msra.mxu0 %v138
    %156 = vmatprep.subr.bf16.mxu0 0
    %157 = vmatpush1.bf16.msra.mxu0 %v139
    %158 = vmatprep.subr.bf16.mxu0 0
    %159 = vmatpush1.bf16.msra.mxu0 %v140
    %160 = vmatprep.subr.bf16.mxu0 0
    %161 = vmatpush1.bf16.msra.mxu0 %v141
    %162 = vmatprep.subr.bf16.mxu0 0
    %163 = vmatpush1.bf16.msra.mxu0 %v142
    %164 = vmatprep.subr.bf16.mxu0 0
    %165 = vmatpush1.bf16.msra.mxu0 %v143
    %166 = vmatprep.subr.bf16.mxu0 0
    %167 = vmatpush1.bf16.msra.mxu0 %v144
    %168 = vmatprep.subr.bf16.mxu0 0
    %169 = vmatpush1.bf16.msra.mxu0 %v145
    %170 = vmatprep.subr.bf16.mxu0 0
    %171 = vmatpush1.bf16.msra.mxu0 0
    %172 = vmatprep.subr.bf16.mxu0 0
    %173 = vmatpush1.bf16.msra.mxu0 0
    %174 = vmatprep.subr.bf16.mxu0 0
    %175 = vmatpush1.bf16.msra.mxu0 0
    %176 = vmatprep.subr.bf16.mxu0 0
    %177 = vmatpush1.bf16.msra.mxu0 0
    %178 = vmatprep.subr.bf16.mxu0 0
    %179 = vmatpush1.bf16.msra.mxu0 0
    %180 = vmatprep.subr.bf16.mxu0 0
    %181 = vmatpush1.bf16.msra.mxu0 0
    %182 = vmatprep.subr.bf16.mxu0 0
    %183 = vmatpush1.bf16.msra.mxu0 0
    %184 = vmatprep.subr.bf16.mxu0 0
    %185 = vmatpush1.bf16.msra.mxu0 0
    %186 = vmatprep.mubr.bf16.mxu0 0
    %187 = vmatmul.mubr.bf16.gmra.mrb[0].mxu0 %v82
    %v188 = vpop.f32.mrb[0].mxu0
    %v189 = vadd.f32 %v104, %v188
    %v190 = vpop.f32.mrb[0].mxu0
    %v191 = vpop.f32.mrb[0].mxu0
    %v192 = vpop.f32.mrb[0].mxu0
    %193 = vdwg.mxu0
    %v194 = vmax.f32 %v189, 0.0
    %v195 = vpack.c.bf16 %v194, %v194
    %196 = vst [vmem:[#allocation2] sm:$0xf] %v195
    %v197 = vld [vmem:[#allocation2] sm:$0xf]
    %v198 = vld [vmem:[#allocation9] sm:$0xf]
    %v199 = vld [vmem:[#allocation9 + $0x4] sm:$0xf]
    %v200 = vld [vmem:[#allocation9 + $0x8] sm:$0xf]
    %v201 = vld [vmem:[#allocation9 + $0xc] sm:$0xf]
    %v202 = vld [vmem:[#allocation9 + $0x10] sm:$0xf]
    %v203 = vld [vmem:[#allocation9 + $0x14] sm:$0xf]
    %v204 = vld [vmem:[#allocation9 + $0x18] sm:$0xf]
    %v205 = vld [vmem:[#allocation9 + $0x1c] sm:$0xf]
    %v206 = vld [vmem:[#allocation9 + $0x20] sm:$0xf]
    %v207 = vld [vmem:[#allocation9 + $0x24] sm:$0xf]
    %v208 = vld [vmem:[#allocation9 + $0x28] sm:$0xf]
    %v209 = vld [vmem:[#allocation9 + $0x2c] sm:$0xf]
    %v210 = vld [vmem:[#allocation9 + $0x30] sm:$0xf]
    %v211 = vld [vmem:[#allocation9 + $0x34] sm:$0xf]
    %v212 = vld [vmem:[#allocation9 + $0x38] sm:$0xf]
    %v213 = vld [vmem:[#allocation9 + $0x3c] sm:$0xf]
    %v214 = vld [vmem:[%s4] sm:$0x1]
    %v216 = vlaneseq
    %v217 = vshrl.u32 %v216, 7
    %v218 = vsub.s32 0, %v217
    %v219 = vrot.slane %v214, %v218
    %v237 = vunpack.c.l.b16 %v198
    %v238 = vunpack.c.l.b16 %v199
    %v239 = vunpack.c.l.b16 %v200
    %v240 = vunpack.c.l.b16 %v201
    %v241 = vunpack.c.l.b16 %v202
    %v242 = vunpack.c.l.b16 %v203
    %v243 = vunpack.c.l.b16 %v204
    %v244 = vunpack.c.l.b16 %v205
    %v245 = vunpack.c.l.b16 %v206
    %v246 = vunpack.c.l.b16 %v207
    %v247 = vunpack.c.l.b16 %v208
    %v248 = vunpack.c.l.b16 %v209
    %v249 = vunpack.c.l.b16 %v210
    %v250 = vunpack.c.l.b16 %v211
    %v251 = vunpack.c.l.b16 %v212
    %v252 = vunpack.c.l.b16 %v213
    %v253 = vpack.c.b16 %v238, %v237
    %v254 = vpack.c.b16 %v240, %v239
    %v255 = vpack.c.b16 %v242, %v241
    %v256 = vpack.c.b16 %v244, %v243
    %v257 = vpack.c.b16 %v246, %v245
    %v258 = vpack.c.b16 %v248, %v247
    %v259 = vpack.c.b16 %v250, %v249
    %v260 = vpack.c.b16 %v252, %v251
    %269 = vmatprep.subr.bf16.mxu0 0
    %270 = vmatpush1.bf16.msra.mxu0 %v253
    %271 = vmatprep.subr.bf16.mxu0 0
    %272 = vmatpush1.bf16.msra.mxu0 %v254
    %273 = vmatprep.subr.bf16.mxu0 0
    %274 = vmatpush1.bf16.msra.mxu0 %v255
    %275 = vmatprep.subr.bf16.mxu0 0
    %276 = vmatpush1.bf16.msra.mxu0 %v256
    %277 = vmatprep.subr.bf16.mxu0 0
    %278 = vmatpush1.bf16.msra.mxu0 %v257
    %279 = vmatprep.subr.bf16.mxu0 0
    %280 = vmatpush1.bf16.msra.mxu0 %v258
    %281 = vmatprep.subr.bf16.mxu0 0
    %282 = vmatpush1.bf16.msra.mxu0 %v259
    %283 = vmatprep.subr.bf16.mxu0 0
    %284 = vmatpush1.bf16.msra.mxu0 %v260
    %285 = vmatprep.subr.bf16.mxu0 0
    %286 = vmatpush1.bf16.msra.mxu0 0
    %287 = vmatprep.subr.bf16.mxu0 0
    %288 = vmatpush1.bf16.msra.mxu0 0
    %289 = vmatprep.subr.bf16.mxu0 0
    %290 = vmatpush1.bf16.msra.mxu0 0
    %291 = vmatprep.subr.bf16.mxu0 0
    %292 = vmatpush1.bf16.msra.mxu0 0
    %293 = vmatprep.subr.bf16.mxu0 0
    %294 = vmatpush1.bf16.msra.mxu0 0
    %295 = vmatprep.subr.bf16.mxu0 0
    %296 = vmatpush1.bf16.msra.mxu0 0
    %297 = vmatprep.subr.bf16.mxu0 0
    %298 = vmatpush1.bf16.msra.mxu0 0
    %299 = vmatprep.subr.bf16.mxu0 0
    %300 = vmatpush1.bf16.msra.mxu0 0
    %301 = vmatprep.mubr.bf16.mxu0 0
    %302 = vmatmul.mubr.bf16.gmra.mrb[0].mxu0 %v197
    %v303 = vpop.f32.mrb[0].mxu0
    %v304 = vadd.f32 %v219, %v303
    %v305 = vpop.f32.mrb[0].mxu0
    %v306 = vpop.f32.mrb[0].mxu0
    %v307 = vpop.f32.mrb[0].mxu0
    %308 = vdwg.mxu0
    %v309 = vmax.f32 %v304, 0.0
    %v310 = vpack.c.bf16 %v309, %v309
    %311 = vst [vmem:[#allocation3] sm:$0xf] %v310
    %v312 = vld [vmem:[#allocation3] sm:$0xf]
    %v313 = vld [vmem:[#allocation10] sm:$0xf]
    %v314 = vld [vmem:[#allocation10 + $0x4] sm:$0xf]
    %v315 = vld [vmem:[#allocation10 + $0x8] sm:$0xf]
    %v316 = vld [vmem:[#allocation10 + $0xc] sm:$0xf]
    %v317 = vld [vmem:[#allocation10 + $0x10] sm:$0xf]
    %v318 = vld [vmem:[#allocation10 + $0x14] sm:$0xf]
    %v319 = vld [vmem:[#allocation10 + $0x18] sm:$0xf]
    %v320 = vld [vmem:[#allocation10 + $0x1c] sm:$0xf]
    %v321 = vld [vmem:[#allocation10 + $0x20] sm:$0xf]
    %v322 = vld [vmem:[#allocation10 + $0x24] sm:$0xf]
    %v323 = vld [vmem:[#allocation10 + $0x28] sm:$0xf]
    %v324 = vld [vmem:[#allocation10 + $0x2c] sm:$0xf]
    %v325 = vld [vmem:[#allocation10 + $0x30] sm:$0xf]
    %v326 = vld [vmem:[#allocation10 + $0x34] sm:$0xf]
    %v327 = vld [vmem:[#allocation10 + $0x38] sm:$0xf]
    %v328 = vld [vmem:[#allocation10 + $0x3c] sm:$0xf]
    %v329 = vld [vmem:[%s6] sm:$0x1]
    %v331 = vlaneseq
    %v332 = vshrl.u32 %v331, 7
    %v333 = vsub.s32 0, %v332
    %v334 = vrot.slane %v329, %v333
    %v352 = vunpack.c.l.b16 %v313
    %v353 = vunpack.c.l.b16 %v314
    %v354 = vunpack.c.l.b16 %v315
    %v355 = vunpack.c.l.b16 %v316
    %v356 = vunpack.c.l.b16 %v317
    %v357 = vunpack.c.l.b16 %v318
    %v358 = vunpack.c.l.b16 %v319
    %v359 = vunpack.c.l.b16 %v320
    %v360 = vunpack.c.l.b16 %v321
    %v361 = vunpack.c.l.b16 %v322
    %v362 = vunpack.c.l.b16 %v323
    %v363 = vunpack.c.l.b16 %v324
    %v364 = vunpack.c.l.b16 %v325
    %v365 = vunpack.c.l.b16 %v326
    %v366 = vunpack.c.l.b16 %v327
    %v367 = vunpack.c.l.b16 %v328
    %v368 = vpack.c.b16 %v353, %v352
    %v369 = vpack.c.b16 %v355, %v354
    %v370 = vpack.c.b16 %v357, %v356
    %v371 = vpack.c.b16 %v359, %v358
    %v372 = vpack.c.b16 %v361, %v360
    %v373 = vpack.c.b16 %v363, %v362
    %v374 = vpack.c.b16 %v365, %v364
    %v375 = vpack.c.b16 %v367, %v366
    %384 = vmatprep.subr.bf16.mxu0 0
    %385 = vmatpush1.bf16.msra.mxu0 %v368
    %386 = vmatprep.subr.bf16.mxu0 0
    %387 = vmatpush1.bf16.msra.mxu0 %v369
    %388 = vmatprep.subr.bf16.mxu0 0
    %389 = vmatpush1.bf16.msra.mxu0 %v370
    %390 = vmatprep.subr.bf16.mxu0 0
    %391 = vmatpush1.bf16.msra.mxu0 %v371
    %392 = vmatprep.subr.bf16.mxu0 0
    %393 = vmatpush1.bf16.msra.mxu0 %v372
    %394 = vmatprep.subr.bf16.mxu0 0
    %395 = vmatpush1.bf16.msra.mxu0 %v373
    %396 = vmatprep.subr.bf16.mxu0 0
    %397 = vmatpush1.bf16.msra.mxu0 %v374
    %398 = vmatprep.subr.bf16.mxu0 0
    %399 = vmatpush1.bf16.msra.mxu0 %v375
    %400 = vmatprep.subr.bf16.mxu0 0
    %401 = vmatpush1.bf16.msra.mxu0 0
    %402 = vmatprep.subr.bf16.mxu0 0
    %403 = vmatpush1.bf16.msra.mxu0 0
    %404 = vmatprep.subr.bf16.mxu0 0
    %405 = vmatpush1.bf16.msra.mxu0 0
    %406 = vmatprep.subr.bf16.mxu0 0
    %407 = vmatpush1.bf16.msra.mxu0 0
    %408 = vmatprep.subr.bf16.mxu0 0
    %409 = vmatpush1.bf16.msra.mxu0 0
    %410 = vmatprep.subr.bf16.mxu0 0
    %411 = vmatpush1.bf16.msra.mxu0 0
    %412 = vmatprep.subr.bf16.mxu0 0
    %413 = vmatpush1.bf16.msra.mxu0 0
    %414 = vmatprep.subr.bf16.mxu0 0
    %415 = vmatpush1.bf16.msra.mxu0 0
    %416 = vmatprep.mubr.bf16.mxu0 0
    %417 = vmatmul.mubr.bf16.gmra.mrb[0].mxu0 %v312
    %v418 = vpop.f32.mrb[0].mxu0
    %v419 = vadd.f32 %v334, %v418
    %v420 = vpop.f32.mrb[0].mxu0
    %v421 = vpop.f32.mrb[0].mxu0
    %v422 = vpop.f32.mrb[0].mxu0
    %423 = vdwg.mxu0
    %424 = vst [vmem:[#allocation12] sm:$0xff] %v419
    // Predicated region
    $region46: #{tpu_custom_call.1} parent=1 // pred_check
      _
    $region47: #{tpu_custom_call.1} parent=1 // pred_check_branch
      %426 = sbr.rel (0) target = $region49
    $region48: #{tpu_custom_call.1} parent=1 // pred_region
      %s428 = ssub.s32 128, 128
      %429 = vsyncadd [#allocation6], %s428
      %s431 = sshll.u32 [#allocation12], 4
      %s432 = int_to_ptr.vmem [resolvable:$true] %s431
      %434 = dma.vmem_to_hbm [thread:$0]  %s432, 128, %s7, [#allocation6]
    $region49: #{tpu_custom_call.1} parent=1 // pred_fallthru
      _
    // Predicated region
    $region50: #{tpu_custom_call.1} parent=1 // pred_check
      _
    $region51: #{tpu_custom_call.1} parent=1 // pred_check_branch
      %436 = sbr.rel (0) target = $region53
    $region52: #{tpu_custom_call.1} parent=1 // pred_region
      %437 = dma.done [#allocation6], 128
    $region53: #{tpu_custom_call.1} parent=1 // pred_fallthru
      _
    %438 = vsyncpa [#allocation5], 1
    %439 = vsyncpa [#allocation8], 1
    %440 = vsyncpa [#allocation11], 1
    %441 = vsyncpa [#allocation6], 1

</llo_original>
